<compile_context>
chip_gen: v7x
topology: tpu7x:2x2x1
jax: 0.10.0
libtpu: 0.0.40
codegen_flags: <defaults>
</compile_context>

<pallas_src>
import functools

import jax
import jax.numpy as jnp
from jax import lax
from jax.experimental import pallas as pl
from jax.experimental.pallas import tpu as pltpu


def _soft_thresh(z, beta):
    # sign(z) * max(|z| - beta, 0)  ==  z - clip(z, -beta, beta)  (cheaper on VPU)
    return z - jnp.clip(z, -beta, beta)


def lista_kernel(w1t_ref, w2c_ref, yt_ref, xt_ref, *, num_layers, beta):
    # Bias term (W2^H @ y)^T = y^T @ conj(W2); identical for every layer ->
    # compute once on the MXU with f32 accumulation.  Shape (B, N), lane-dense.
    b = jnp.dot(yt_ref[...], w2c_ref[...], preferred_element_type=jnp.float32)

    w1t = w1t_ref[...]          # bf16 (N, N), resident across all layers
    x0 = jnp.zeros_like(b)      # f32  (B, N)

    def body(_, x):
        # bf16 MXU inputs, f32 accumulation; soft-threshold in f32 on the VPU.
        z = jnp.dot(x.astype(w1t.dtype), w1t,
                    preferred_element_type=jnp.float32) + b
        return _soft_thresh(z, beta)

    # num_layers is small & static: unroll so MXU/VPU work of adjacent layers
    # can be interleaved by the scheduler.
    x = lax.fori_loop(0, num_layers, body, x0, unroll=True)
    xt_ref[...] = x.astype(xt_ref.dtype)


def lista_forward(y, w1, w2, *, num_layers=10, beta=0.01):
    """y: (M, B), w1: (N, N), w2: (M, N)  ->  x: (N, B).  Real dtypes only."""
    n = w1.shape[0]
    bsz = y.shape[1]

    # Transposed, lane-dense operands (one-time XLA-side layout prep; W2 needs
    # no transpose at all — only a conj, which is a no-op for real inputs).
    w1t = w1.T.astype(jnp.bfloat16)           # (N, N)
    w2c = jnp.conj(w2).astype(jnp.bfloat16)   # (M, N)
    yt = y.T.astype(jnp.bfloat16)             # (B, M)

    kernel = functools.partial(lista_kernel,
                               num_layers=num_layers, beta=float(beta))
    xt = pl.pallas_call(
        kernel,
        out_shape=jax.ShapeDtypeStruct((bsz, n), y.dtype),
        in_specs=[
            pl.BlockSpec(memory_space=pltpu.VMEM),   # W1^T      (N, N)
            pl.BlockSpec(memory_space=pltpu.VMEM),   # conj(W2)  (M, N)
            pl.BlockSpec(memory_space=pltpu.VMEM),   # y^T       (B, M)
        ],
        out_specs=pl.BlockSpec(memory_space=pltpu.VMEM),  # x^T (B, N), lane-dense
    )(w1t, w2c, yt)
    return xt.T  # back to the module's (N, B) layout


def lista_reference_f32(y, w1, w2, *, num_layers=10, beta=0.01):
    """Pure-JAX f32 reference mirroring the PyTorch module exactly."""
    w2c = jnp.conj(w2).T
    x = jnp.zeros((w1.shape[0], y.shape[1]), dtype=y.dtype)
    for _ in range(num_layers):
        z = w1 @ x + w2c @ y
        x = z - jnp.clip(z, -beta, beta)
    return x


def lista_reference_matched(y, w1, w2, *, num_layers=10, beta=0.01):
    """Pure-JAX reference using the same bf16-in / f32-accumulate math as the kernel."""
    w1t = w1.T.astype(jnp.bfloat16)
    w2c = jnp.conj(w2).astype(jnp.bfloat16)
    yt = y.T.astype(jnp.bfloat16)
    b = jnp.dot(yt, w2c, preferred_element_type=jnp.float32)
    x = jnp.zeros_like(b)
    for _ in range(num_layers):
        z = jnp.dot(x.astype(jnp.bfloat16), w1t,
                    preferred_element_type=jnp.float32) + b
        x = z - jnp.clip(z, -beta, beta)
    return x.T.astype(y.dtype)


if __name__ == "__main__":
    # Small deterministic problem: N=128 dictionary atoms (lane-dense),
    # M=64 measurements, B=8 batch columns (one sublane group), 10 layers.
    N, M, B = 128, 64, 8
    num_layers, beta = 10, 0.01

    key = jax.random.PRNGKey(0)
    k1, k2, k3 = jax.random.split(key, 3)
    # Scale W1 so its spectral norm is < 1 (stable fixed-point iteration).
    W1 = jax.random.normal(k1, (N, N), dtype=jnp.float32) * (0.4 / jnp.sqrt(N))
    W2 = jax.random.normal(k2, (M, N), dtype=jnp.float32) / jnp.sqrt(M)
    y = jax.random.normal(k3, (M, B), dtype=jnp.float32)

    x_kernel = lista_forward(y, W1, W2, num_layers=num_layers, beta=beta)
    jax.block_until_ready(x_kernel)
    assert x_kernel.shape == (N, B)

    # Tight check against a reference using identical bf16/f32 math.
    x_matched = lista_reference_matched(y, W1, W2, num_layers=num_layers, beta=beta)
    assert jnp.allclose(x_kernel, x_matched, atol=2e-3, rtol=2e-3), \
        "mismatch vs matched bf16 reference"

    # Relaxed check against the full-f32 PyTorch-equivalent reference
    # (bf16 MXU inputs compound slightly over 10 layers).
    x_f32 = lista_reference_f32(y, W1, W2, num_layers=num_layers, beta=beta)
    assert jnp.allclose(x_kernel, x_f32, atol=1e-1, rtol=1e-1), \
        "mismatch vs f32 reference"

    print("KERNEL_OK")
</pallas_src>

<mosaic_0001>
module attributes {stable_mosaic.version = 11 : i64} {
  func.func @lista_kernel(%arg0: memref<128x128xbf16, #tpu.memory_space<vmem>>, %arg1: memref<64x128xbf16, #tpu.memory_space<vmem>>, %arg2: memref<8x64xbf16, #tpu.memory_space<vmem>>, %arg3: memref<8x128xf32, #tpu.memory_space<vmem>>) attributes {dimension_semantics = [], scalar_prefetch = 0 : i64, scratch_operands = 0 : i64, tpu.core_type = #tpu.core_type<tc>} {
    %c0 = arith.constant 0 : index
    %c0_0 = arith.constant 0 : index
    %0 = vector.load %arg2[%c0, %c0_0] : memref<8x64xbf16, #tpu.memory_space<vmem>>, vector<8x64xbf16>
    %c0_1 = arith.constant 0 : index
    %c0_2 = arith.constant 0 : index
    %1 = vector.load %arg1[%c0_1, %c0_2] : memref<64x128xbf16, #tpu.memory_space<vmem>>, vector<64x128xbf16>
    %cst = arith.constant dense<0.000000e+00> : vector<8x128xf32>
    %2 = tpu.matmul %0, %1, %cst {dimension_numbers = #tpu.dot_dimension_numbers<[1], [0], [0], [1], [0, 0, 1, 1], [], []>} : vector<8x64xbf16>, vector<64x128xbf16>, vector<8x128xf32> -> vector<8x128xf32>
    %c0_3 = arith.constant 0 : index
    %c0_4 = arith.constant 0 : index
    %3 = vector.load %arg0[%c0_3, %c0_4] : memref<128x128xbf16, #tpu.memory_space<vmem>>, vector<128x128xbf16>
    %cst_5 = arith.constant 0.000000e+00 : f32
    %4 = vector.broadcast %cst_5 : f32 to vector<8x128xf32>
    %c0_i32 = arith.constant 0 : i32
    %5 = arith.truncf %4 : vector<8x128xf32> to vector<8x128xbf16>
    %cst_6 = arith.constant dense<0.000000e+00> : vector<8x128xf32>
    %6 = tpu.matmul %5, %3, %cst_6 {dimension_numbers = #tpu.dot_dimension_numbers<[1], [0], [0], [1], [0, 0, 1, 1], [], []>} : vector<8x128xbf16>, vector<128x128xbf16>, vector<8x128xf32> -> vector<8x128xf32>
    %7 = arith.addf %6, %2 : vector<8x128xf32>
    %cst_7 = arith.constant -0.00999999977 : f32
    %cst_8 = arith.constant 0.00999999977 : f32
    %8 = vector.broadcast %cst_7 : f32 to vector<8x128xf32>
    %9 = arith.maximumf %8, %7 : vector<8x128xf32>
    %10 = vector.broadcast %cst_8 : f32 to vector<8x128xf32>
    %11 = arith.minimumf %10, %9 : vector<8x128xf32>
    %12 = arith.subf %7, %11 : vector<8x128xf32>
    %c1_i32 = arith.constant 1 : i32
    %13 = arith.truncf %12 : vector<8x128xf32> to vector<8x128xbf16>
    %cst_9 = arith.constant dense<0.000000e+00> : vector<8x128xf32>
    %14 = tpu.matmul %13, %3, %cst_9 {dimension_numbers = #tpu.dot_dimension_numbers<[1], [0], [0], [1], [0, 0, 1, 1], [], []>} : vector<8x128xbf16>, vector<128x128xbf16>, vector<8x128xf32> -> vector<8x128xf32>
    %15 = arith.addf %14, %2 : vector<8x128xf32>
    %cst_10 = arith.constant -0.00999999977 : f32
    %cst_11 = arith.constant 0.00999999977 : f32
    %16 = vector.broadcast %cst_10 : f32 to vector<8x128xf32>
    %17 = arith.maximumf %16, %15 : vector<8x128xf32>
    %18 = vector.broadcast %cst_11 : f32 to vector<8x128xf32>
    %19 = arith.minimumf %18, %17 : vector<8x128xf32>
    %20 = arith.subf %15, %19 : vector<8x128xf32>
    %c2_i32 = arith.constant 2 : i32
    %21 = arith.truncf %20 : vector<8x128xf32> to vector<8x128xbf16>
    %cst_12 = arith.constant dense<0.000000e+00> : vector<8x128xf32>
    %22 = tpu.matmul %21, %3, %cst_12 {dimension_numbers = #tpu.dot_dimension_numbers<[1], [0], [0], [1], [0, 0, 1, 1], [], []>} : vector<8x128xbf16>, vector<128x128xbf16>, vector<8x128xf32> -> vector<8x128xf32>
    %23 = arith.addf %22, %2 : vector<8x128xf32>
    %cst_13 = arith.constant -0.00999999977 : f32
    %cst_14 = arith.constant 0.00999999977 : f32
    %24 = vector.broadcast %cst_13 : f32 to vector<8x128xf32>
    %25 = arith.maximumf %24, %23 : vector<8x128xf32>
    %26 = vector.broadcast %cst_14 : f32 to vector<8x128xf32>
    %27 = arith.minimumf %26, %25 : vector<8x128xf32>
    %28 = arith.subf %23, %27 : vector<8x128xf32>
    %c3_i32 = arith.constant 3 : i32
    %29 = arith.truncf %28 : vector<8x128xf32> to vector<8x128xbf16>
    %cst_15 = arith.constant dense<0.000000e+00> : vector<8x128xf32>
    %30 = tpu.matmul %29, %3, %cst_15 {dimension_numbers = #tpu.dot_dimension_numbers<[1], [0], [0], [1], [0, 0, 1, 1], [], []>} : vector<8x128xbf16>, vector<128x128xbf16>, vector<8x128xf32> -> vector<8x128xf32>
    %31 = arith.addf %30, %2 : vector<8x128xf32>
    %cst_16 = arith.constant -0.00999999977 : f32
    %cst_17 = arith.constant 0.00999999977 : f32
    %32 = vector.broadcast %cst_16 : f32 to vector<8x128xf32>
    %33 = arith.maximumf %32, %31 : vector<8x128xf32>
    %34 = vector.broadcast %cst_17 : f32 to vector<8x128xf32>
    %35 = arith.minimumf %34, %33 : vector<8x128xf32>
    %36 = arith.subf %31, %35 : vector<8x128xf32>
    %c4_i32 = arith.constant 4 : i32
    %37 = arith.truncf %36 : vector<8x128xf32> to vector<8x128xbf16>
    %cst_18 = arith.constant dense<0.000000e+00> : vector<8x128xf32>
    %38 = tpu.matmul %37, %3, %cst_18 {dimension_numbers = #tpu.dot_dimension_numbers<[1], [0], [0], [1], [0, 0, 1, 1], [], []>} : vector<8x128xbf16>, vector<128x128xbf16>, vector<8x128xf32> -> vector<8x128xf32>
    %39 = arith.addf %38, %2 : vector<8x128xf32>
    %cst_19 = arith.constant -0.00999999977 : f32
    %cst_20 = arith.constant 0.00999999977 : f32
    %40 = vector.broadcast %cst_19 : f32 to vector<8x128xf32>
    %41 = arith.maximumf %40, %39 : vector<8x128xf32>
    %42 = vector.broadcast %cst_20 : f32 to vector<8x128xf32>
    %43 = arith.minimumf %42, %41 : vector<8x128xf32>
    %44 = arith.subf %39, %43 : vector<8x128xf32>
    %c5_i32 = arith.constant 5 : i32
    %45 = arith.truncf %44 : vector<8x128xf32> to vector<8x128xbf16>
    %cst_21 = arith.constant dense<0.000000e+00> : vector<8x128xf32>
    %46 = tpu.matmul %45, %3, %cst_21 {dimension_numbers = #tpu.dot_dimension_numbers<[1], [0], [0], [1], [0, 0, 1, 1], [], []>} : vector<8x128xbf16>, vector<128x128xbf16>, vector<8x128xf32> -> vector<8x128xf32>
    %47 = arith.addf %46, %2 : vector<8x128xf32>
    %cst_22 = arith.constant -0.00999999977 : f32
    %cst_23 = arith.constant 0.00999999977 : f32
    %48 = vector.broadcast %cst_22 : f32 to vector<8x128xf32>
    %49 = arith.maximumf %48, %47 : vector<8x128xf32>
    %50 = vector.broadcast %cst_23 : f32 to vector<8x128xf32>
    %51 = arith.minimumf %50, %49 : vector<8x128xf32>
    %52 = arith.subf %47, %51 : vector<8x128xf32>
    %c6_i32 = arith.constant 6 : i32
    %53 = arith.truncf %52 : vector<8x128xf32> to vector<8x128xbf16>
    %cst_24 = arith.constant dense<0.000000e+00> : vector<8x128xf32>
    %54 = tpu.matmul %53, %3, %cst_24 {dimension_numbers = #tpu.dot_dimension_numbers<[1], [0], [0], [1], [0, 0, 1, 1], [], []>} : vector<8x128xbf16>, vector<128x128xbf16>, vector<8x128xf32> -> vector<8x128xf32>
    %55 = arith.addf %54, %2 : vector<8x128xf32>
    %cst_25 = arith.constant -0.00999999977 : f32
    %cst_26 = arith.constant 0.00999999977 : f32
    %56 = vector.broadcast %cst_25 : f32 to vector<8x128xf32>
    %57 = arith.maximumf %56, %55 : vector<8x128xf32>
    %58 = vector.broadcast %cst_26 : f32 to vector<8x128xf32>
    %59 = arith.minimumf %58, %57 : vector<8x128xf32>
    %60 = arith.subf %55, %59 : vector<8x128xf32>
    %c7_i32 = arith.constant 7 : i32
    %61 = arith.truncf %60 : vector<8x128xf32> to vector<8x128xbf16>
    %cst_27 = arith.constant dense<0.000000e+00> : vector<8x128xf32>
    %62 = tpu.matmul %61, %3, %cst_27 {dimension_numbers = #tpu.dot_dimension_numbers<[1], [0], [0], [1], [0, 0, 1, 1], [], []>} : vector<8x128xbf16>, vector<128x128xbf16>, vector<8x128xf32> -> vector<8x128xf32>
    %63 = arith.addf %62, %2 : vector<8x128xf32>
    %cst_28 = arith.constant -0.00999999977 : f32
    %cst_29 = arith.constant 0.00999999977 : f32
    %64 = vector.broadcast %cst_28 : f32 to vector<8x128xf32>
    %65 = arith.maximumf %64, %63 : vector<8x128xf32>
    %66 = vector.broadcast %cst_29 : f32 to vector<8x128xf32>
    %67 = arith.minimumf %66, %65 : vector<8x128xf32>
    %68 = arith.subf %63, %67 : vector<8x128xf32>
    %c8_i32 = arith.constant 8 : i32
    %69 = arith.truncf %68 : vector<8x128xf32> to vector<8x128xbf16>
    %cst_30 = arith.constant dense<0.000000e+00> : vector<8x128xf32>
    %70 = tpu.matmul %69, %3, %cst_30 {dimension_numbers = #tpu.dot_dimension_numbers<[1], [0], [0], [1], [0, 0, 1, 1], [], []>} : vector<8x128xbf16>, vector<128x128xbf16>, vector<8x128xf32> -> vector<8x128xf32>
    %71 = arith.addf %70, %2 : vector<8x128xf32>
    %cst_31 = arith.constant -0.00999999977 : f32
    %cst_32 = arith.constant 0.00999999977 : f32
    %72 = vector.broadcast %cst_31 : f32 to vector<8x128xf32>
    %73 = arith.maximumf %72, %71 : vector<8x128xf32>
    %74 = vector.broadcast %cst_32 : f32 to vector<8x128xf32>
    %75 = arith.minimumf %74, %73 : vector<8x128xf32>
    %76 = arith.subf %71, %75 : vector<8x128xf32>
    %c9_i32 = arith.constant 9 : i32
    %77 = arith.truncf %76 : vector<8x128xf32> to vector<8x128xbf16>
    %cst_33 = arith.constant dense<0.000000e+00> : vector<8x128xf32>
    %78 = tpu.matmul %77, %3, %cst_33 {dimension_numbers = #tpu.dot_dimension_numbers<[1], [0], [0], [1], [0, 0, 1, 1], [], []>} : vector<8x128xbf16>, vector<128x128xbf16>, vector<8x128xf32> -> vector<8x128xf32>
    %79 = arith.addf %78, %2 : vector<8x128xf32>
    %cst_34 = arith.constant -0.00999999977 : f32
    %cst_35 = arith.constant 0.00999999977 : f32
    %80 = vector.broadcast %cst_34 : f32 to vector<8x128xf32>
    %81 = arith.maximumf %80, %79 : vector<8x128xf32>
    %82 = vector.broadcast %cst_35 : f32 to vector<8x128xf32>
    %83 = arith.minimumf %82, %81 : vector<8x128xf32>
    %84 = arith.subf %79, %83 : vector<8x128xf32>
    %c0_36 = arith.constant 0 : index
    %c0_37 = arith.constant 0 : index
    %85 = vector.load %arg3[%c0_36, %c0_37] : memref<8x128xf32, #tpu.memory_space<vmem>>, vector<8x128xf32>
    tpu.vector_store %arg3[%c0_36, %c0_37], %84 {strides = array<i32>} : memref<8x128xf32, #tpu.memory_space<vmem>>, vector<8x128xf32>,
    return
  }
}

</mosaic_0001>

<llo_original>
// kernel: tpu_custom_call.1
$region0: #{tpu_custom_call.1}
  #allocation0 [shape = 'u32[]', space=smem, size = 0x4, offset = 0x4, fixed_abs, tag = 'smem constant byte address 0x4 - core index']
  #allocation1 [shape = 'u32[144,128]{1,0:T(1,128)}', space=vmem, size = 0x12000, scoped, tag = 'internal scratch']
  %s0 = inlined_call_operand.hbm [shape: bf16[128,128], index: 0, kind: input, shape index: {}]
  %s1 = inlined_call_operand.hbm [shape: bf16[64,128], index: 1, kind: input, shape index: {}]
  %s2 = inlined_call_operand.vmem [shape: bf16[8,64], index: 2, kind: input, shape index: {}]
  %s3 = inlined_call_operand.hbm [shape: f32[8,128], index: 3, kind: output, shape index: {}]
  %s4 = sld [smem:[#allocation0]]
  $region30: #{tpu_custom_call.1} parent=0
    _
  %s6 = ssub.s32 1, %s4
  %s7 = scalar_select 0, %s6, %s4
  $region1: #{tpu_custom_call.1} parent=0
    #allocation2 [shape = 'u8[32768]{0}', space=vmem, size = 0x8000, scoped, tag = 'input window, operand 0, single buffered']
    #allocation3 [shape = 's32[1]{0}', space=sflag, size = 0x4, scoped, tag = 'scoped memory for tpu_custom_call.1']
    #allocation4 [shape = 's32[1]{0}', space=sflag, size = 0x4, scoped, tag = 'scoped memory for tpu_custom_call.1']
    #allocation5 [shape = 'u8[16384]{0}', space=vmem, size = 0x4000, scoped, tag = 'input window, operand 1, single buffered']
    #allocation6 [shape = 's32[1]{0}', space=sflag, size = 0x4, scoped, tag = 'scoped memory for tpu_custom_call.1']
    #allocation7 [shape = 'u8[4096]{0}', space=vmem, size = 0x1000, scoped, tag = 'output window, operand 0, single buffered']
    %8 = vsyncpa [#allocation3], 0
    %9 = vsyncpa [#allocation6], 0
    %10 = vsyncpa [#allocation4], 0
    // Predicated region
    $region2: #{tpu_custom_call.1} parent=1 // pred_check
      _
    $region3: #{tpu_custom_call.1} parent=1 // pred_check_branch
      %12 = sbr.rel (0) target = $region5
    $region4: #{tpu_custom_call.1} parent=1 // pred_region
      %s14 = ssub.s32 1024, 1024
      %15 = vsyncadd [#allocation3], %s14
      %s16 = sshll.u32 [#allocation2], 4
      %s17 = int_to_ptr.vmem [resolvable:$true] %s16
      %22 = dma.hbm_to_vmem [thread:$0]  %s0, 1024, %s17, [#allocation3], 64, 64, 4
    $region5: #{tpu_custom_call.1} parent=1 // pred_fallthru
      _
    // Predicated region
    $region6: #{tpu_custom_call.1} parent=1 // pred_check
      _
    $region7: #{tpu_custom_call.1} parent=1 // pred_check_branch
      %24 = sbr.rel (0) target = $region9
    $region8: #{tpu_custom_call.1} parent=1 // pred_region
      %s26 = ssub.s32 512, 512
      %27 = vsyncadd [#allocation6], %s26
      %s28 = sshll.u32 [#allocation5], 4
      %s29 = int_to_ptr.vmem [resolvable:$true] %s28
      %34 = dma.hbm_to_vmem [thread:$0]  %s1, 512, %s29, [#allocation6], 64, 64, 4
    $region9: #{tpu_custom_call.1} parent=1 // pred_fallthru
      _
    // Predicated region
    $region10: #{tpu_custom_call.1} parent=1 // pred_check
      _
    $region11: #{tpu_custom_call.1} parent=1 // pred_check_branch
      %36 = sbr.rel (0) target = $region13
    $region12: #{tpu_custom_call.1} parent=1 // pred_region
      _
    $region13: #{tpu_custom_call.1} parent=1 // pred_fallthru
      _
    // Predicated region
    $region14: #{tpu_custom_call.1} parent=1 // pred_check
      _
    $region15: #{tpu_custom_call.1} parent=1 // pred_check_branch
      %38 = sbr.rel (0) target = $region17
    $region16: #{tpu_custom_call.1} parent=1 // pred_region
      %39 = dma.done [#allocation3], 1024
    $region17: #{tpu_custom_call.1} parent=1 // pred_fallthru
      _
    // Predicated region
    $region18: #{tpu_custom_call.1} parent=1 // pred_check
      _
    $region19: #{tpu_custom_call.1} parent=1 // pred_check_branch
      %41 = sbr.rel (0) target = $region21
    $region20: #{tpu_custom_call.1} parent=1 // pred_region
      %42 = dma.done [#allocation6], 512
    $region21: #{tpu_custom_call.1} parent=1 // pred_fallthru
      _
    %v44 = vld [vmem:[%s2] sm:$0xf]
    %v45 = vld [vmem:[#allocation5] sm:$0xf]
    %v46 = vld [vmem:[#allocation5 + $0x4] sm:$0xf]
    %v47 = vld [vmem:[#allocation5 + $0x8] sm:$0xf]
    %v48 = vld [vmem:[#allocation5 + $0xc] sm:$0xf]
    %v49 = vld [vmem:[#allocation5 + $0x10] sm:$0xf]
    %v50 = vld [vmem:[#allocation5 + $0x14] sm:$0xf]
    %v51 = vld [vmem:[#allocation5 + $0x18] sm:$0xf]
    %v52 = vld [vmem:[#allocation5 + $0x1c] sm:$0xf]
    %v61 = vunpack.c.l.b16 %v45
    %v62 = vunpack.c.l.b16 %v46
    %v63 = vunpack.c.l.b16 %v47
    %v64 = vunpack.c.l.b16 %v48
    %v65 = vunpack.c.l.b16 %v49
    %v66 = vunpack.c.l.b16 %v50
    %v67 = vunpack.c.l.b16 %v51
    %v68 = vunpack.c.l.b16 %v52
    %v69 = vpack.c.b16 %v62, %v61
    %v70 = vpack.c.b16 %v64, %v63
    %v71 = vpack.c.b16 %v66, %v65
    %v72 = vpack.c.b16 %v68, %v67
    %vm77 = vcmask 523264
    %v79 = vsel %vm77, %v44, 0
    %81 = vmatprep.subr.bf16.mxu0 0
    %82 = vmatpush1.bf16.msra.mxu0 %v69
    %83 = vmatprep.subr.bf16.mxu0 0
    %84 = vmatpush1.bf16.msra.mxu0 %v70
    %85 = vmatprep.subr.bf16.mxu0 0
    %86 = vmatpush1.bf16.msra.mxu0 %v71
    %87 = vmatprep.subr.bf16.mxu0 0
    %88 = vmatpush1.bf16.msra.mxu0 %v72
    %89 = vmatprep.subr.bf16.mxu0 0
    %90 = vmatpush1.bf16.msra.mxu0 0
    %91 = vmatprep.subr.bf16.mxu0 0
    %92 = vmatpush1.bf16.msra.mxu0 0
    %93 = vmatprep.subr.bf16.mxu0 0
    %94 = vmatpush1.bf16.msra.mxu0 0
    %95 = vmatprep.subr.bf16.mxu0 0
    %96 = vmatpush1.bf16.msra.mxu0 0
    %97 = vmatprep.subr.bf16.mxu0 0
    %98 = vmatpush1.bf16.msra.mxu0 0
    %99 = vmatprep.subr.bf16.mxu0 0
    %100 = vmatpush1.bf16.msra.mxu0 0
    %101 = vmatprep.subr.bf16.mxu0 0
    %102 = vmatpush1.bf16.msra.mxu0 0
    %103 = vmatprep.subr.bf16.mxu0 0
    %104 = vmatpush1.bf16.msra.mxu0 0
    %105 = vmatprep.subr.bf16.mxu0 0
    %106 = vmatpush1.bf16.msra.mxu0 0
    %107 = vmatprep.subr.bf16.mxu0 0
    %108 = vmatpush1.bf16.msra.mxu0 0
    %109 = vmatprep.subr.bf16.mxu0 0
    %110 = vmatpush1.bf16.msra.mxu0 0
    %111 = vmatprep.subr.bf16.mxu0 0
    %112 = vmatpush1.bf16.msra.mxu0 0
    %113 = vmatprep.mubr.bf16.mxu0 0
    %114 = vmatmul.mubr.bf16.gmra.mrb[0].mxu0 %v79
    %v115 = vpop.f32.mrb[0].mxu0
    %v116 = vadd.f32 0.0, %v115
    %v117 = vpop.f32.mrb[0].mxu0
    %v118 = vpop.f32.mrb[0].mxu0
    %v119 = vpop.f32.mrb[0].mxu0
    %120 = vdwg.mxu0
    %v121 = vld [vmem:[#allocation2] sm:$0xf]
    %v122 = vld [vmem:[#allocation2 + $0x4] sm:$0xf]
    %v123 = vld [vmem:[#allocation2 + $0x8] sm:$0xf]
    %v124 = vld [vmem:[#allocation2 + $0xc] sm:$0xf]
    %v125 = vld [vmem:[#allocation2 + $0x10] sm:$0xf]
    %v126 = vld [vmem:[#allocation2 + $0x14] sm:$0xf]
    %v127 = vld [vmem:[#allocation2 + $0x18] sm:$0xf]
    %v128 = vld [vmem:[#allocation2 + $0x1c] sm:$0xf]
    %v129 = vld [vmem:[#allocation2 + $0x20] sm:$0xf]
    %v130 = vld [vmem:[#allocation2 + $0x24] sm:$0xf]
    %v131 = vld [vmem:[#allocation2 + $0x28] sm:$0xf]
    %v132 = vld [vmem:[#allocation2 + $0x2c] sm:$0xf]
    %v133 = vld [vmem:[#allocation2 + $0x30] sm:$0xf]
    %v134 = vld [vmem:[#allocation2 + $0x34] sm:$0xf]
    %v135 = vld [vmem:[#allocation2 + $0x38] sm:$0xf]
    %v136 = vld [vmem:[#allocation2 + $0x3c] sm:$0xf]
    %v153 = vunpack.c.l.b16 %v121
    %v154 = vunpack.c.l.b16 %v122
    %v155 = vunpack.c.l.b16 %v123
    %v156 = vunpack.c.l.b16 %v124
    %v157 = vunpack.c.l.b16 %v125
    %v158 = vunpack.c.l.b16 %v126
    %v159 = vunpack.c.l.b16 %v127
    %v160 = vunpack.c.l.b16 %v128
    %v161 = vunpack.c.l.b16 %v129
    %v162 = vunpack.c.l.b16 %v130
    %v163 = vunpack.c.l.b16 %v131
    %v164 = vunpack.c.l.b16 %v132
    %v165 = vunpack.c.l.b16 %v133
    %v166 = vunpack.c.l.b16 %v134
    %v167 = vunpack.c.l.b16 %v135
    %v168 = vunpack.c.l.b16 %v136
    %v169 = vpack.c.b16 %v154, %v153
    %v170 = vpack.c.b16 %v156, %v155
    %v171 = vpack.c.b16 %v158, %v157
    %v172 = vpack.c.b16 %v160, %v159
    %v173 = vpack.c.b16 %v162, %v161
    %v174 = vpack.c.b16 %v164, %v163
    %v175 = vpack.c.b16 %v166, %v165
    %v176 = vpack.c.b16 %v168, %v167
    %185 = vmatprep.subr.bf16.mxu0 0
    %186 = vmatpush1.bf16.msra.mxu0 %v169
    %187 = vmatprep.subr.bf16.mxu0 0
    %188 = vmatpush1.bf16.msra.mxu0 %v170
    %189 = vmatprep.subr.bf16.mxu0 0
    %190 = vmatpush1.bf16.msra.mxu0 %v171
    %191 = vmatprep.subr.bf16.mxu0 0
    %192 = vmatpush1.bf16.msra.mxu0 %v172
    %193 = vmatprep.subr.bf16.mxu0 0
    %194 = vmatpush1.bf16.msra.mxu0 %v173
    %195 = vmatprep.subr.bf16.mxu0 0
    %196 = vmatpush1.bf16.msra.mxu0 %v174
    %197 = vmatprep.subr.bf16.mxu0 0
    %198 = vmatpush1.bf16.msra.mxu0 %v175
    %199 = vmatprep.subr.bf16.mxu0 0
    %200 = vmatpush1.bf16.msra.mxu0 %v176
    %201 = vmatprep.subr.bf16.mxu0 0
    %202 = vmatpush1.bf16.msra.mxu0 0
    %203 = vmatprep.subr.bf16.mxu0 0
    %204 = vmatpush1.bf16.msra.mxu0 0
    %205 = vmatprep.subr.bf16.mxu0 0
    %206 = vmatpush1.bf16.msra.mxu0 0
    %207 = vmatprep.subr.bf16.mxu0 0
    %208 = vmatpush1.bf16.msra.mxu0 0
    %209 = vmatprep.subr.bf16.mxu0 0
    %210 = vmatpush1.bf16.msra.mxu0 0
    %211 = vmatprep.subr.bf16.mxu0 0
    %212 = vmatpush1.bf16.msra.mxu0 0
    %213 = vmatprep.subr.bf16.mxu0 0
    %214 = vmatpush1.bf16.msra.mxu0 0
    %215 = vmatprep.subr.bf16.mxu0 0
    %216 = vmatpush1.bf16.msra.mxu0 0
    %217 = vmatprep.mubr.bf16.mxu0 0
    %218 = vmatmul.mubr.bf16.gmra.mrb[0].mxu0 0
    %v219 = vpop.f32.mrb[0].mxu0
    %v220 = vadd.f32 %v116, %v219
    %v221 = vpop.f32.mrb[0].mxu0
    %v222 = vpop.f32.mrb[0].mxu0
    %v223 = vpop.f32.mrb[0].mxu0
    %224 = vdwg.mxu0
    %v225 = vmax.f32 %v220, -0.01
    %v226 = vmin.f32 %v225, 0.01
    %v227 = vsub.f32 %v220, %v226
    %v228 = vpack.c.bf16 %v227, %v227
    %229 = vmatprep.subr.bf16.mxu0 0
    %230 = vmatpush1.bf16.msra.mxu0 %v169
    %231 = vmatprep.subr.bf16.mxu0 0
    %232 = vmatpush1.bf16.msra.mxu0 %v170
    %233 = vmatprep.subr.bf16.mxu0 0
    %234 = vmatpush1.bf16.msra.mxu0 %v171
    %235 = vmatprep.subr.bf16.mxu0 0
    %236 = vmatpush1.bf16.msra.mxu0 %v172
    %237 = vmatprep.subr.bf16.mxu0 0
    %238 = vmatpush1.bf16.msra.mxu0 %v173
    %239 = vmatprep.subr.bf16.mxu0 0
    %240 = vmatpush1.bf16.msra.mxu0 %v174
    %241 = vmatprep.subr.bf16.mxu0 0
    %242 = vmatpush1.bf16.msra.mxu0 %v175
    %243 = vmatprep.subr.bf16.mxu0 0
    %244 = vmatpush1.bf16.msra.mxu0 %v176
    %245 = vmatprep.subr.bf16.mxu0 0
    %246 = vmatpush1.bf16.msra.mxu0 0
    %247 = vmatprep.subr.bf16.mxu0 0
    %248 = vmatpush1.bf16.msra.mxu0 0
    %249 = vmatprep.subr.bf16.mxu0 0
    %250 = vmatpush1.bf16.msra.mxu0 0
    %251 = vmatprep.subr.bf16.mxu0 0
    %252 = vmatpush1.bf16.msra.mxu0 0
    %253 = vmatprep.subr.bf16.mxu0 0
    %254 = vmatpush1.bf16.msra.mxu0 0
    %255 = vmatprep.subr.bf16.mxu0 0
    %256 = vmatpush1.bf16.msra.mxu0 0
    %257 = vmatprep.subr.bf16.mxu0 0
    %258 = vmatpush1.bf16.msra.mxu0 0
    %259 = vmatprep.subr.bf16.mxu0 0
    %260 = vmatpush1.bf16.msra.mxu0 0
    %261 = vmatprep.mubr.bf16.mxu0 0
    %262 = vmatmul.mubr.bf16.gmra.mrb[0].mxu0 %v228
    %v263 = vpop.f32.mrb[0].mxu0
    %v264 = vadd.f32 %v116, %v263
    %v265 = vpop.f32.mrb[0].mxu0
    %v266 = vpop.f32.mrb[0].mxu0
    %v267 = vpop.f32.mrb[0].mxu0
    %268 = vdwg.mxu0
    %v269 = vmax.f32 %v264, -0.01
    %v270 = vmin.f32 %v269, 0.01
    %v271 = vsub.f32 %v264, %v270
    %v272 = vpack.c.bf16 %v271, %v271
    %273 = vmatprep.subr.bf16.mxu0 0
    %274 = vmatpush1.bf16.msra.mxu0 %v169
    %275 = vmatprep.subr.bf16.mxu0 0
    %276 = vmatpush1.bf16.msra.mxu0 %v170
    %277 = vmatprep.subr.bf16.mxu0 0
    %278 = vmatpush1.bf16.msra.mxu0 %v171
    %279 = vmatprep.subr.bf16.mxu0 0
    %280 = vmatpush1.bf16.msra.mxu0 %v172
    %281 = vmatprep.subr.bf16.mxu0 0
    %282 = vmatpush1.bf16.msra.mxu0 %v173
    %283 = vmatprep.subr.bf16.mxu0 0
    %284 = vmatpush1.bf16.msra.mxu0 %v174
    %285 = vmatprep.subr.bf16.mxu0 0
    %286 = vmatpush1.bf16.msra.mxu0 %v175
    %287 = vmatprep.subr.bf16.mxu0 0
    %288 = vmatpush1.bf16.msra.mxu0 %v176
    %289 = vmatprep.subr.bf16.mxu0 0
    %290 = vmatpush1.bf16.msra.mxu0 0
    %291 = vmatprep.subr.bf16.mxu0 0
    %292 = vmatpush1.bf16.msra.mxu0 0
    %293 = vmatprep.subr.bf16.mxu0 0
    %294 = vmatpush1.bf16.msra.mxu0 0
    %295 = vmatprep.subr.bf16.mxu0 0
    %296 = vmatpush1.bf16.msra.mxu0 0
    %297 = vmatprep.subr.bf16.mxu0 0
    %298 = vmatpush1.bf16.msra.mxu0 0
    %299 = vmatprep.subr.bf16.mxu0 0
    %300 = vmatpush1.bf16.msra.mxu0 0
    %301 = vmatprep.subr.bf16.mxu0 0
    %302 = vmatpush1.bf16.msra.mxu0 0
    %303 = vmatprep.subr.bf16.mxu0 0
    %304 = vmatpush1.bf16.msra.mxu0 0
    %305 = vmatprep.mubr.bf16.mxu0 0
    %306 = vmatmul.mubr.bf16.gmra.mrb[0].mxu0 %v272
    %v307 = vpop.f32.mrb[0].mxu0
    %v308 = vadd.f32 %v116, %v307
    %v309 = vpop.f32.mrb[0].mxu0
    %v310 = vpop.f32.mrb[0].mxu0
    %v311 = vpop.f32.mrb[0].mxu0
    %312 = vdwg.mxu0
    %v313 = vmax.f32 %v308, -0.01
    %v314 = vmin.f32 %v313, 0.01
    %v315 = vsub.f32 %v308, %v314
    %v316 = vpack.c.bf16 %v315, %v315
    %317 = vmatprep.subr.bf16.mxu0 0
    %318 = vmatpush1.bf16.msra.mxu0 %v169
    %319 = vmatprep.subr.bf16.mxu0 0
    %320 = vmatpush1.bf16.msra.mxu0 %v170
    %321 = vmatprep.subr.bf16.mxu0 0
    %322 = vmatpush1.bf16.msra.mxu0 %v171
    %323 = vmatprep.subr.bf16.mxu0 0
    %324 = vmatpush1.bf16.msra.mxu0 %v172
    %325 = vmatprep.subr.bf16.mxu0 0
    %326 = vmatpush1.bf16.msra.mxu0 %v173
    %327 = vmatprep.subr.bf16.mxu0 0
    %328 = vmatpush1.bf16.msra.mxu0 %v174
    %329 = vmatprep.subr.bf16.mxu0 0
    %330 = vmatpush1.bf16.msra.mxu0 %v175
    %331 = vmatprep.subr.bf16.mxu0 0
    %332 = vmatpush1.bf16.msra.mxu0 %v176
    %333 = vmatprep.subr.bf16.mxu0 0
    %334 = vmatpush1.bf16.msra.mxu0 0
    %335 = vmatprep.subr.bf16.mxu0 0
    %336 = vmatpush1.bf16.msra.mxu0 0
    %337 = vmatprep.subr.bf16.mxu0 0
    %338 = vmatpush1.bf16.msra.mxu0 0
    %339 = vmatprep.subr.bf16.mxu0 0
    %340 = vmatpush1.bf16.msra.mxu0 0
    %341 = vmatprep.subr.bf16.mxu0 0
    %342 = vmatpush1.bf16.msra.mxu0 0
    %343 = vmatprep.subr.bf16.mxu0 0
    %344 = vmatpush1.bf16.msra.mxu0 0
    %345 = vmatprep.subr.bf16.mxu0 0
    %346 = vmatpush1.bf16.msra.mxu0 0
    %347 = vmatprep.subr.bf16.mxu0 0
    %348 = vmatpush1.bf16.msra.mxu0 0
    %349 = vmatprep.mubr.bf16.mxu0 0
    %350 = vmatmul.mubr.bf16.gmra.mrb[0].mxu0 %v316
    %v351 = vpop.f32.mrb[0].mxu0
    %v352 = vadd.f32 %v116, %v351
    %v353 = vpop.f32.mrb[0].mxu0
    %v354 = vpop.f32.mrb[0].mxu0
    %v355 = vpop.f32.mrb[0].mxu0
    %356 = vdwg.mxu0
    %v357 = vmax.f32 %v352, -0.01
    %v358 = vmin.f32 %v357, 0.01
    %v359 = vsub.f32 %v352, %v358
    %v360 = vpack.c.bf16 %v359, %v359
    %361 = vmatprep.subr.bf16.mxu0 0
    %362 = vmatpush1.bf16.msra.mxu0 %v169
    %363 = vmatprep.subr.bf16.mxu0 0
    %364 = vmatpush1.bf16.msra.mxu0 %v170
    %365 = vmatprep.subr.bf16.mxu0 0
    %366 = vmatpush1.bf16.msra.mxu0 %v171
    %367 = vmatprep.subr.bf16.mxu0 0
    %368 = vmatpush1.bf16.msra.mxu0 %v172
    %369 = vmatprep.subr.bf16.mxu0 0
    %370 = vmatpush1.bf16.msra.mxu0 %v173
    %371 = vmatprep.subr.bf16.mxu0 0
    %372 = vmatpush1.bf16.msra.mxu0 %v174
    %373 = vmatprep.subr.bf16.mxu0 0
    %374 = vmatpush1.bf16.msra.mxu0 %v175
    %375 = vmatprep.subr.bf16.mxu0 0
    %376 = vmatpush1.bf16.msra.mxu0 %v176
    %377 = vmatprep.subr.bf16.mxu0 0
    %378 = vmatpush1.bf16.msra.mxu0 0
    %379 = vmatprep.subr.bf16.mxu0 0
    %380 = vmatpush1.bf16.msra.mxu0 0
    %381 = vmatprep.subr.bf16.mxu0 0
    %382 = vmatpush1.bf16.msra.mxu0 0
    %383 = vmatprep.subr.bf16.mxu0 0
    %384 = vmatpush1.bf16.msra.mxu0 0
    %385 = vmatprep.subr.bf16.mxu0 0
    %386 = vmatpush1.bf16.msra.mxu0 0
    %387 = vmatprep.subr.bf16.mxu0 0
    %388 = vmatpush1.bf16.msra.mxu0 0
    %389 = vmatprep.subr.bf16.mxu0 0
    %390 = vmatpush1.bf16.msra.mxu0 0
    %391 = vmatprep.subr.bf16.mxu0 0
    %392 = vmatpush1.bf16.msra.mxu0 0
    %393 = vmatprep.mubr.bf16.mxu0 0
    %394 = vmatmul.mubr.bf16.gmra.mrb[0].mxu0 %v360
    %v395 = vpop.f32.mrb[0].mxu0
    %v396 = vadd.f32 %v116, %v395
    %v397 = vpop.f32.mrb[0].mxu0
    %v398 = vpop.f32.mrb[0].mxu0
    %v399 = vpop.f32.mrb[0].mxu0
    %400 = vdwg.mxu0
    %v401 = vmax.f32 %v396, -0.01
    %v402 = vmin.f32 %v401, 0.01
    %v403 = vsub.f32 %v396, %v402
    %v404 = vpack.c.bf16 %v403, %v403
    %405 = vmatprep.subr.bf16.mxu0 0
    %406 = vmatpush1.bf16.msra.mxu0 %v169
    %407 = vmatprep.subr.bf16.mxu0 0
    %408 = vmatpush1.bf16.msra.mxu0 %v170
    %409 = vmatprep.subr.bf16.mxu0 0
    %410 = vmatpush1.bf16.msra.mxu0 %v171
    %411 = vmatprep.subr.bf16.mxu0 0
    %412 = vmatpush1.bf16.msra.mxu0 %v172
    %413 = vmatprep.subr.bf16.mxu0 0
    %414 = vmatpush1.bf16.msra.mxu0 %v173
    %415 = vmatprep.subr.bf16.mxu0 0
    %416 = vmatpush1.bf16.msra.mxu0 %v174
    %417 = vmatprep.subr.bf16.mxu0 0
    %418 = vmatpush1.bf16.msra.mxu0 %v175
    %419 = vmatprep.subr.bf16.mxu0 0
    %420 = vmatpush1.bf16.msra.mxu0 %v176
    %421 = vmatprep.subr.bf16.mxu0 0
    %422 = vmatpush1.bf16.msra.mxu0 0
    %423 = vmatprep.subr.bf16.mxu0 0
    %424 = vmatpush1.bf16.msra.mxu0 0
    %425 = vmatprep.subr.bf16.mxu0 0
    %426 = vmatpush1.bf16.msra.mxu0 0
    %427 = vmatprep.subr.bf16.mxu0 0
    %428 = vmatpush1.bf16.msra.mxu0 0
    %429 = vmatprep.subr.bf16.mxu0 0
    %430 = vmatpush1.bf16.msra.mxu0 0
    %431 = vmatprep.subr.bf16.mxu0 0
    %432 = vmatpush1.bf16.msra.mxu0 0
    %433 = vmatprep.subr.bf16.mxu0 0
    %434 = vmatpush1.bf16.msra.mxu0 0
    %435 = vmatprep.subr.bf16.mxu0 0
    %436 = vmatpush1.bf16.msra.mxu0 0
    %437 = vmatprep.mubr.bf16.mxu0 0
    %438 = vmatmul.mubr.bf16.gmra.mrb[0].mxu0 %v404
    %v439 = vpop.f32.mrb[0].mxu0
    %v440 = vadd.f32 %v116, %v439
    %v441 = vpop.f32.mrb[0].mxu0
    %v442 = vpop.f32.mrb[0].mxu0
    %v443 = vpop.f32.mrb[0].mxu0
    %444 = vdwg.mxu0
    %v445 = vmax.f32 %v440, -0.01
    %v446 = vmin.f32 %v445, 0.01
    %v447 = vsub.f32 %v440, %v446
    %v448 = vpack.c.bf16 %v447, %v447
    %449 = vmatprep.subr.bf16.mxu0 0
    %450 = vmatpush1.bf16.msra.mxu0 %v169
    %451 = vmatprep.subr.bf16.mxu0 0
    %452 = vmatpush1.bf16.msra.mxu0 %v170
    %453 = vmatprep.subr.bf16.mxu0 0
    %454 = vmatpush1.bf16.msra.mxu0 %v171
    %455 = vmatprep.subr.bf16.mxu0 0
    %456 = vmatpush1.bf16.msra.mxu0 %v172
    %457 = vmatprep.subr.bf16.mxu0 0
    %458 = vmatpush1.bf16.msra.mxu0 %v173
    %459 = vmatprep.subr.bf16.mxu0 0
    %460 = vmatpush1.bf16.msra.mxu0 %v174
    %461 = vmatprep.subr.bf16.mxu0 0
    %462 = vmatpush1.bf16.msra.mxu0 %v175
    %463 = vmatprep.subr.bf16.mxu0 0
    %464 = vmatpush1.bf16.msra.mxu0 %v176
    %465 = vmatprep.subr.bf16.mxu0 0
    %466 = vmatpush1.bf16.msra.mxu0 0
    %467 = vmatprep.subr.bf16.mxu0 0
    %468 = vmatpush1.bf16.msra.mxu0 0
    %469 = vmatprep.subr.bf16.mxu0 0
    %470 = vmatpush1.bf16.msra.mxu0 0
    %471 = vmatprep.subr.bf16.mxu0 0
    %472 = vmatpush1.bf16.msra.mxu0 0
    %473 = vmatprep.subr.bf16.mxu0 0
    %474 = vmatpush1.bf16.msra.mxu0 0
    %475 = vmatprep.subr.bf16.mxu0 0
    %476 = vmatpush1.bf16.msra.mxu0 0
    %477 = vmatprep.subr.bf16.mxu0 0
    %478 = vmatpush1.bf16.msra.mxu0 0
    %479 = vmatprep.subr.bf16.mxu0 0
    %480 = vmatpush1.bf16.msra.mxu0 0
    %481 = vmatprep.mubr.bf16.mxu0 0
    %482 = vmatmul.mubr.bf16.gmra.mrb[0].mxu0 %v448
    %v483 = vpop.f32.mrb[0].mxu0
    %v484 = vadd.f32 %v116, %v483
    %v485 = vpop.f32.mrb[0].mxu0
    %v486 = vpop.f32.mrb[0].mxu0
    %v487 = vpop.f32.mrb[0].mxu0
    %488 = vdwg.mxu0
    %v489 = vmax.f32 %v484, -0.01
    %v490 = vmin.f32 %v489, 0.01
    %v491 = vsub.f32 %v484, %v490
    %v492 = vpack.c.bf16 %v491, %v491
    %493 = vmatprep.subr.bf16.mxu0 0
    %494 = vmatpush1.bf16.msra.mxu0 %v169
    %495 = vmatprep.subr.bf16.mxu0 0
    %496 = vmatpush1.bf16.msra.mxu0 %v170
    %497 = vmatprep.subr.bf16.mxu0 0
    %498 = vmatpush1.bf16.msra.mxu0 %v171
    %499 = vmatprep.subr.bf16.mxu0 0
    %500 = vmatpush1.bf16.msra.mxu0 %v172
    %501 = vmatprep.subr.bf16.mxu0 0
    %502 = vmatpush1.bf16.msra.mxu0 %v173
    %503 = vmatprep.subr.bf16.mxu0 0
    %504 = vmatpush1.bf16.msra.mxu0 %v174
    %505 = vmatprep.subr.bf16.mxu0 0
    %506 = vmatpush1.bf16.msra.mxu0 %v175
    %507 = vmatprep.subr.bf16.mxu0 0
    %508 = vmatpush1.bf16.msra.mxu0 %v176
    %509 = vmatprep.subr.bf16.mxu0 0
    %510 = vmatpush1.bf16.msra.mxu0 0
    %511 = vmatprep.subr.bf16.mxu0 0
    %512 = vmatpush1.bf16.msra.mxu0 0
    %513 = vmatprep.subr.bf16.mxu0 0
    %514 = vmatpush1.bf16.msra.mxu0 0
    %515 = vmatprep.subr.bf16.mxu0 0
    %516 = vmatpush1.bf16.msra.mxu0 0
    %517 = vmatprep.subr.bf16.mxu0 0
    %518 = vmatpush1.bf16.msra.mxu0 0
    %519 = vmatprep.subr.bf16.mxu0 0
    %520 = vmatpush1.bf16.msra.mxu0 0
    %521 = vmatprep.subr.bf16.mxu0 0
    %522 = vmatpush1.bf16.msra.mxu0 0
    %523 = vmatprep.subr.bf16.mxu0 0
    %524 = vmatpush1.bf16.msra.mxu0 0
    %525 = vmatprep.mubr.bf16.mxu0 0
    %526 = vmatmul.mubr.bf16.gmra.mrb[0].mxu0 %v492
    %v527 = vpop.f32.mrb[0].mxu0
    %v528 = vadd.f32 %v116, %v527
    %v529 = vpop.f32.mrb[0].mxu0
    %v530 = vpop.f32.mrb[0].mxu0
    %v531 = vpop.f32.mrb[0].mxu0
    %532 = vdwg.mxu0
    %v533 = vmax.f32 %v528, -0.01
    %v534 = vmin.f32 %v533, 0.01
    %v535 = vsub.f32 %v528, %v534
    %v536 = vpack.c.bf16 %v535, %v535
    %537 = vmatprep.subr.bf16.mxu0 0
    %538 = vmatpush1.bf16.msra.mxu0 %v169
    %539 = vmatprep.subr.bf16.mxu0 0
    %540 = vmatpush1.bf16.msra.mxu0 %v170
    %541 = vmatprep.subr.bf16.mxu0 0
    %542 = vmatpush1.bf16.msra.mxu0 %v171
    %543 = vmatprep.subr.bf16.mxu0 0
    %544 = vmatpush1.bf16.msra.mxu0 %v172
    %545 = vmatprep.subr.bf16.mxu0 0
    %546 = vmatpush1.bf16.msra.mxu0 %v173
    %547 = vmatprep.subr.bf16.mxu0 0
    %548 = vmatpush1.bf16.msra.mxu0 %v174
    %549 = vmatprep.subr.bf16.mxu0 0
    %550 = vmatpush1.bf16.msra.mxu0 %v175
    %551 = vmatprep.subr.bf16.mxu0 0
    %552 = vmatpush1.bf16.msra.mxu0 %v176
    %553 = vmatprep.subr.bf16.mxu0 0
    %554 = vmatpush1.bf16.msra.mxu0 0
    %555 = vmatprep.subr.bf16.mxu0 0
    %556 = vmatpush1.bf16.msra.mxu0 0
    %557 = vmatprep.subr.bf16.mxu0 0
    %558 = vmatpush1.bf16.msra.mxu0 0
    %559 = vmatprep.subr.bf16.mxu0 0
    %560 = vmatpush1.bf16.msra.mxu0 0
    %561 = vmatprep.subr.bf16.mxu0 0
    %562 = vmatpush1.bf16.msra.mxu0 0
    %563 = vmatprep.subr.bf16.mxu0 0
    %564 = vmatpush1.bf16.msra.mxu0 0
    %565 = vmatprep.subr.bf16.mxu0 0
    %566 = vmatpush1.bf16.msra.mxu0 0
    %567 = vmatprep.subr.bf16.mxu0 0
    %568 = vmatpush1.bf16.msra.mxu0 0
    %569 = vmatprep.mubr.bf16.mxu0 0
    %570 = vmatmul.mubr.bf16.gmra.mrb[0].mxu0 %v536
    %v571 = vpop.f32.mrb[0].mxu0
    %v572 = vadd.f32 %v116, %v571
    %v573 = vpop.f32.mrb[0].mxu0
    %v574 = vpop.f32.mrb[0].mxu0
    %v575 = vpop.f32.mrb[0].mxu0
    %576 = vdwg.mxu0
    %v577 = vmax.f32 %v572, -0.01
    %v578 = vmin.f32 %v577, 0.01
    %v579 = vsub.f32 %v572, %v578
    %v580 = vpack.c.bf16 %v579, %v579
    %581 = vmatprep.subr.bf16.mxu0 0
    %582 = vmatpush1.bf16.msra.mxu0 %v169
    %583 = vmatprep.subr.bf16.mxu0 0
    %584 = vmatpush1.bf16.msra.mxu0 %v170
    %585 = vmatprep.subr.bf16.mxu0 0
    %586 = vmatpush1.bf16.msra.mxu0 %v171
    %587 = vmatprep.subr.bf16.mxu0 0
    %588 = vmatpush1.bf16.msra.mxu0 %v172
    %589 = vmatprep.subr.bf16.mxu0 0
    %590 = vmatpush1.bf16.msra.mxu0 %v173
    %591 = vmatprep.subr.bf16.mxu0 0
    %592 = vmatpush1.bf16.msra.mxu0 %v174
    %593 = vmatprep.subr.bf16.mxu0 0
    %594 = vmatpush1.bf16.msra.mxu0 %v175
    %595 = vmatprep.subr.bf16.mxu0 0
    %596 = vmatpush1.bf16.msra.mxu0 %v176
    %597 = vmatprep.subr.bf16.mxu0 0
    %598 = vmatpush1.bf16.msra.mxu0 0
    %599 = vmatprep.subr.bf16.mxu0 0
    %600 = vmatpush1.bf16.msra.mxu0 0
    %601 = vmatprep.subr.bf16.mxu0 0
    %602 = vmatpush1.bf16.msra.mxu0 0
    %603 = vmatprep.subr.bf16.mxu0 0
    %604 = vmatpush1.bf16.msra.mxu0 0
    %605 = vmatprep.subr.bf16.mxu0 0
    %606 = vmatpush1.bf16.msra.mxu0 0
    %607 = vmatprep.subr.bf16.mxu0 0
    %608 = vmatpush1.bf16.msra.mxu0 0
    %609 = vmatprep.subr.bf16.mxu0 0
    %610 = vmatpush1.bf16.msra.mxu0 0
    %611 = vmatprep.subr.bf16.mxu0 0
    %612 = vmatpush1.bf16.msra.mxu0 0
    %613 = vmatprep.mubr.bf16.mxu0 0
    %614 = vmatmul.mubr.bf16.gmra.mrb[0].mxu0 %v580
    %v615 = vpop.f32.mrb[0].mxu0
    %v616 = vadd.f32 %v116, %v615
    %v617 = vpop.f32.mrb[0].mxu0
    %v618 = vpop.f32.mrb[0].mxu0
    %v619 = vpop.f32.mrb[0].mxu0
    %620 = vdwg.mxu0
    %v621 = vmax.f32 %v616, -0.01
    %v622 = vmin.f32 %v621, 0.01
    %v623 = vsub.f32 %v616, %v622
    %624 = vst [vmem:[#allocation7] sm:$0xff] %v623
    // Predicated region
    $region22: #{tpu_custom_call.1} parent=1 // pred_check
      _
    $region23: #{tpu_custom_call.1} parent=1 // pred_check_branch
      %626 = sbr.rel (0) target = $region25
    $region24: #{tpu_custom_call.1} parent=1 // pred_region
      %s628 = ssub.s32 128, 128
      %629 = vsyncadd [#allocation4], %s628
      %s631 = sshll.u32 [#allocation7], 4
      %s632 = int_to_ptr.vmem [resolvable:$true] %s631
      %634 = dma.vmem_to_hbm [thread:$0]  %s632, 128, %s3, [#allocation4]
    $region25: #{tpu_custom_call.1} parent=1 // pred_fallthru
      _
    // Predicated region
    $region26: #{tpu_custom_call.1} parent=1 // pred_check
      _
    $region27: #{tpu_custom_call.1} parent=1 // pred_check_branch
      %636 = sbr.rel (0) target = $region29
    $region28: #{tpu_custom_call.1} parent=1 // pred_region
      %637 = dma.done [#allocation4], 128
    $region29: #{tpu_custom_call.1} parent=1 // pred_fallthru
      _
    %638 = vsyncpa [#allocation3], 1
    %639 = vsyncpa [#allocation6], 1
    %640 = vsyncpa [#allocation4], 1

</llo_original>
